<compile_context>
chip_gen: v5e
topology: v5e:2x2
jax: 0.10.0
libtpu: 0.0.40
codegen_flags: <defaults>
</compile_context>

<pallas_src>
import jax
import jax.numpy as jnp
from jax import lax
from jax.experimental import pallas as pl
from jax.experimental.pallas import tpu as pltpu

HIDDEN = 64        # fc1 output width (nn.Linear(input_size, 64))
C_SUB = 8          # num_classes padded onto 8 sublanes of the output tile
SMALL_BATCH = 256  # below this, plain XLA-fused jnp beats a custom call
TM_MAX = 2048      # max batch-tile rows (amortizes per-step pipeline overhead)


def _round_up(x, m):
    return (x + m - 1) // m * m


def _choose_tiling(batch):
    """Returns (TM, padded_batch)."""
    if batch < SMALL_BATCH:
        # Single tile: any multiple of 8 is a legal (sub-lane aligned) block.
        tm = max(8, _round_up(batch, 8))
        return tm, tm
    # Multi-tile: TM must be a multiple of 128 (lane-dense output tile) and we
    # want >= 2 grid steps so the "parallel" axis uses both v7x TensorCores.
    tm = min(TM_MAX, _round_up(pl.cdiv(batch, 2), 128))
    return tm, _round_up(batch, tm)


def _mlp_kernel(x_ref, w1_ref, b1_ref, w2t_ref, b2_ref, o_ref):
    # fc1: (TM, K) f32 @ (K, 64) f32 -> (TM, 64) f32 on the MXU, bias + ReLU.
    h = jnp.dot(x_ref[...], w1_ref[...], preferred_element_type=jnp.float32)
    h = jnp.maximum(h + b1_ref[...], 0.0)
    # fc2 in transposed space: contract w2t (C_SUB, 64) with h (TM, 64) along
    # the hidden dim -> (C_SUB, TM).  Classes sit on sublanes, batch on lanes,
    # so the output tile is lane-dense and 16x smaller than a (TM,128) slab.
    out_t = lax.dot_general(
        w2t_ref[...], h,
        dimension_numbers=(((1,), (1,)), ((), ())),
        preferred_element_type=jnp.float32)
    o_ref[...] = out_t + b2_ref[...]          # b2: (C_SUB, 1), lane-broadcast


def prepare_params(w1, b1, w2, b2):
    """One-time parameter prep (not per forward).
    w1: (input_size, 64), b1: (64,), w2: (64, num_classes), b2: (num_classes,).
    Returns kernel-layout params; classes padded onto C_SUB sublanes."""
    in_features, hidden = w1.shape
    num_classes = w2.shape[1]
    assert hidden == HIDDEN and num_classes <= C_SUB
    w1p = w1.astype(jnp.float32)
    b1p = b1.reshape(1, HIDDEN).astype(jnp.float32)
    w2t = jnp.pad(w2.T, ((0, C_SUB - num_classes), (0, 0))).astype(jnp.float32)
    b2p = jnp.pad(b2, (0, C_SUB - num_classes)).reshape(C_SUB, 1).astype(jnp.float32)
    return w1p, b1p, w2t, b2p, num_classes


def _forward_jnp(x, w1, b1, w2t, b2, num_classes):
    h = jnp.maximum(x @ w1 + b1, 0.0)
    return h @ w2t[:num_classes].T + b2[:num_classes, 0]


def _forward_pallas(x, w1, b1, w2t, b2, num_classes):
    batch, k = x.shape
    tm, b_pad = _choose_tiling(batch)
    xp = x if b_pad == batch else jnp.pad(x, ((0, b_pad - batch), (0, 0)))

    out_t = pl.pallas_call(
        _mlp_kernel,
        out_shape=jax.ShapeDtypeStruct((C_SUB, b_pad), jnp.float32),
        grid_spec=pltpu.PrefetchScalarGridSpec(
            num_scalar_prefetch=0,
            grid=(b_pad // tm,),
            in_specs=[
                # streamed per grid step (f32, cast-free, full last dim = legal)
                pl.BlockSpec((tm, k), lambda i: (i, 0)),
                # VMEM-resident across the whole grid (constant block index)
                pl.BlockSpec((k, HIDDEN), lambda i: (0, 0)),
                pl.BlockSpec((1, HIDDEN), lambda i: (0, 0)),
                pl.BlockSpec((C_SUB, HIDDEN), lambda i: (0, 0)),
                pl.BlockSpec((C_SUB, 1), lambda i: (0, 0)),
            ],
            out_specs=pl.BlockSpec((C_SUB, tm), lambda i: (0, i)),
        ),
        compiler_params=pltpu.CompilerParams(
            dimension_semantics=("parallel",)),   # batch axis over both TCs (v7x)
    )(xp, w1, b1, w2t, b2)

    # Tiny (num_classes, B) slice + transpose back to (B, num_classes).
    return out_t[:num_classes, :batch].T


def cancer_classifier_forward(x, w1, b1, w2t, b2, num_classes, *,
                              force_pallas=False):
    """x: (B, input_size) f32 -> (B, num_classes) f32 logits."""
    if not force_pallas and x.shape[0] < SMALL_BATCH:
        return _forward_jnp(x, w1, b1, w2t, b2, num_classes)
    return _forward_pallas(x, w1, b1, w2t, b2, num_classes)


def init_params(key, input_size, num_classes, hidden=HIDDEN):
    """Deterministic init mirroring nn.Linear (stored pre-transposed (in, out))."""
    k1, k2, k3, k4 = jax.random.split(key, 4)
    bound1 = 1.0 / jnp.sqrt(input_size)
    bound2 = 1.0 / jnp.sqrt(hidden)
    w1 = jax.random.uniform(k1, (input_size, hidden), jnp.float32, -bound1, bound1)
    b1 = jax.random.uniform(k2, (hidden,), jnp.float32, -bound1, bound1)
    w2 = jax.random.uniform(k3, (hidden, num_classes), jnp.float32, -bound2, bound2)
    b2 = jax.random.uniform(k4, (num_classes,), jnp.float32, -bound2, bound2)
    return w1, b1, w2, b2


if __name__ == "__main__":
    INPUT_SIZE = 250      # top_n_genes after variance selection
    NUM_CLASSES = 5

    key = jax.random.PRNGKey(0)
    kx1, kx2, kp = jax.random.split(key, 3)
    w1, b1, w2, b2 = init_params(kp, INPUT_SIZE, NUM_CLASSES)
    params = prepare_params(w1, b1, w2, b2)      # one-time prep

    def ref(x):  # pure-f32 module semantics
        return jnp.maximum(x @ w1 + b1, 0.0) @ w2 + b2

    # 1) Small batch: exercise the Pallas kernel explicitly (single tile) and
    #    the default small-batch XLA fast path.
    x_small = jax.random.normal(kx1, (8, INPUT_SIZE), jnp.float32)
    out_pl = jax.block_until_ready(
        cancer_classifier_forward(x_small, *params, force_pallas=True))
    assert out_pl.shape == (8, NUM_CLASSES)
    assert jnp.allclose(out_pl, ref(x_small), atol=1e-2, rtol=1e-2)
    out_fast = jax.block_until_ready(cancer_classifier_forward(x_small, *params))
    assert jnp.allclose(out_fast, ref(x_small), atol=1e-2, rtol=1e-2)

    # 2) Mid batch (not a tile multiple): multi-tile Pallas path with batch
    #    padding and >= 2 parallel grid steps (megacore on v7x).
    x_mid = jax.random.normal(kx2, (384, INPUT_SIZE), jnp.float32)
    out_mid = jax.block_until_ready(cancer_classifier_forward(x_mid, *params))
    assert out_mid.shape == (384, NUM_CLASSES)
    assert jnp.allclose(out_mid, ref(x_mid), atol=1e-2, rtol=1e-2)

    print("KERNEL_OK")
</pallas_src>

<mosaic_0001>
module attributes {stable_mosaic.version = 11 : i64} {
  func.func @_mlp_kernel(%arg0: i32, %arg1: memref<8x250xf32, #tpu.memory_space<vmem>>, %arg2: memref<250x64xf32, #tpu.memory_space<vmem>>, %arg3: memref<1x64xf32, #tpu.memory_space<vmem>>, %arg4: memref<8x64xf32, #tpu.memory_space<vmem>>, %arg5: memref<8x1xf32, #tpu.memory_space<vmem>>, %arg6: memref<8x8xf32, #tpu.memory_space<vmem>>) attributes {dimension_semantics = [#tpu.dimension_semantics<parallel>], iteration_bounds = array<i64: 1>, scalar_prefetch = 0 : i64, scratch_operands = 0 : i64, tpu.core_type = #tpu.core_type<tc>, window_params = [{transform_indices = @transform_0, window_bounds = array<i64: 8, 250>}, {pipeline_mode = #tpu.pipeline_mode<synchronous>, transform_indices = @transform_1, window_bounds = array<i64: 250, 64>}, {pipeline_mode = #tpu.pipeline_mode<synchronous>, transform_indices = @transform_2, window_bounds = array<i64: 1, 64>}, {pipeline_mode = #tpu.pipeline_mode<synchronous>, transform_indices = @transform_3, window_bounds = array<i64: 8, 64>}, {pipeline_mode = #tpu.pipeline_mode<synchronous>, transform_indices = @transform_4, window_bounds = array<i64: 8, 1>}, {transform_indices = @transform_5, window_bounds = array<i64: 8, 8>}]} {
    %c0 = arith.constant 0 : index
    %c0_0 = arith.constant 0 : index
    %0 = vector.load %arg1[%c0, %c0_0] : memref<8x250xf32, #tpu.memory_space<vmem>>, vector<8x250xf32>
    %c0_1 = arith.constant 0 : index
    %c0_2 = arith.constant 0 : index
    %1 = vector.load %arg2[%c0_1, %c0_2] : memref<250x64xf32, #tpu.memory_space<vmem>>, vector<250x64xf32>
    %cst = arith.constant dense<0.000000e+00> : vector<8x64xf32>
    %2 = tpu.matmul %0, %1, %cst {dimension_numbers = #tpu.dot_dimension_numbers<[1], [0], [0], [1], [0, 0, 1, 1], [], []>} : vector<8x250xf32>, vector<250x64xf32>, vector<8x64xf32> -> vector<8x64xf32>
    %c0_3 = arith.constant 0 : index
    %c0_4 = arith.constant 0 : index
    %3 = vector.load %arg3[%c0_3, %c0_4] : memref<1x64xf32, #tpu.memory_space<vmem>>, vector<1x64xf32>
    %4 = vector.broadcast %3 : vector<1x64xf32> to vector<8x64xf32>
    %5 = arith.addf %2, %4 : vector<8x64xf32>
    %cst_5 = arith.constant 0.000000e+00 : f32
    %6 = vector.broadcast %cst_5 : f32 to vector<8x64xf32>
    %7 = arith.maximumf %5, %6 : vector<8x64xf32>
    %c0_6 = arith.constant 0 : index
    %c0_7 = arith.constant 0 : index
    %8 = vector.load %arg4[%c0_6, %c0_7] : memref<8x64xf32, #tpu.memory_space<vmem>>, vector<8x64xf32>
    %cst_8 = arith.constant dense<0.000000e+00> : vector<8x8xf32>
    %9 = tpu.matmul %8, %7, %cst_8 {dimension_numbers = #tpu.dot_dimension_numbers<[1], [1], [0], [0], [0, 0, 1, 0], [], []>} : vector<8x64xf32>, vector<8x64xf32>, vector<8x8xf32> -> vector<8x8xf32>
    %c0_9 = arith.constant 0 : index
    %c0_10 = arith.constant 0 : index
    %10 = vector.load %arg5[%c0_9, %c0_10] : memref<8x1xf32, #tpu.memory_space<vmem>>, vector<8x1xf32>
    %11 = vector.broadcast %10 : vector<8x1xf32> to vector<8x8xf32>
    %12 = arith.addf %9, %11 : vector<8x8xf32>
    %c0_11 = arith.constant 0 : index
    %c0_12 = arith.constant 0 : index
    %13 = vector.load %arg6[%c0_11, %c0_12] : memref<8x8xf32, #tpu.memory_space<vmem>>, vector<8x8xf32>
    tpu.vector_store %arg6[%c0_11, %c0_12], %12 {strides = array<i32>} : memref<8x8xf32, #tpu.memory_space<vmem>>, vector<8x8xf32>,
    return
  }
  func.func @transform_0(%arg0: i32) -> (i32, i32) {
    %c0_i32 = arith.constant 0 : i32
    %c0_i32_0 = arith.constant 0 : i32
    return %arg0, %c0_i32 : i32, i32
  }
  func.func @transform_1(%arg0: i32) -> (i32, i32) {
    %c0_i32 = arith.constant 0 : i32
    %c0_i32_0 = arith.constant 0 : i32
    %c0_i32_1 = arith.constant 0 : i32
    return %c0_i32, %c0_i32_0 : i32, i32
  }
  func.func @transform_2(%arg0: i32) -> (i32, i32) {
    %c0_i32 = arith.constant 0 : i32
    %c0_i32_0 = arith.constant 0 : i32
    %c0_i32_1 = arith.constant 0 : i32
    return %c0_i32, %c0_i32_0 : i32, i32
  }
  func.func @transform_3(%arg0: i32) -> (i32, i32) {
    %c0_i32 = arith.constant 0 : i32
    %c0_i32_0 = arith.constant 0 : i32
    %c0_i32_1 = arith.constant 0 : i32
    return %c0_i32, %c0_i32_0 : i32, i32
  }
  func.func @transform_4(%arg0: i32) -> (i32, i32) {
    %c0_i32 = arith.constant 0 : i32
    %c0_i32_0 = arith.constant 0 : i32
    %c0_i32_1 = arith.constant 0 : i32
    return %c0_i32, %c0_i32_0 : i32, i32
  }
  func.func @transform_5(%arg0: i32) -> (i32, i32) {
    %c0_i32 = arith.constant 0 : i32
    %c0_i32_0 = arith.constant 0 : i32
    return %c0_i32, %arg0 : i32, i32
  }
}

</mosaic_0001>

<llo_original>
// kernel: tpu_custom_call.1
$region0: #{tpu_custom_call.1}
  #allocation0 [shape = 'u32[]', space=smem, size = 0x4, offset = 0x4, fixed_abs, tag = 'smem constant byte address 0x4 - core index']
  #allocation1 [shape = 'u32[72,128]{1,0:T(1,128)}', space=vmem, size = 0x9000, scoped, tag = 'internal scratch']
  %s0 = inlined_call_operand.vmem [shape: f32[8,250], index: 0, kind: input, shape index: {}]
  %s1 = inlined_call_operand.vmem [shape: f32[250,64], index: 1, kind: input, shape index: {}]
  %s2 = inlined_call_operand.vmem [shape: f32[1,64], index: 2, kind: input, shape index: {}]
  %s3 = inlined_call_operand.vmem [shape: f32[8,64], index: 3, kind: input, shape index: {}]
  %s4 = inlined_call_operand.vmem [shape: f32[8,1], index: 4, kind: input, shape index: {}]
  %s5 = inlined_call_operand.hbm [shape: f32[8,8], index: 5, kind: output, shape index: {}]
  %s6 = sld [smem:[#allocation0]]
  $region30: #{tpu_custom_call.1} parent=0
    _
  %s8 = ssub.s32 1, %s6
  %s9 = scalar_select 0, %s8, %s6
  $region1: #{tpu_custom_call.1} parent=0
    #allocation2 [shape = 'u8[4096]{0}', space=vmem, size = 0x1000, scoped, tag = 'output window, operand 0, single buffered']
    #allocation3 [shape = 's32[1]{0}', space=sflag, size = 0x4, scoped, tag = 'scoped memory for tpu_custom_call.1']
    %10 = vsyncpa [#allocation3], 0
    // Predicated region
    $region2: #{tpu_custom_call.1} parent=1 // pred_check
      _
    $region3: #{tpu_custom_call.1} parent=1 // pred_check_branch
      %12 = sbr.rel (0) target = $region5
    $region4: #{tpu_custom_call.1} parent=1 // pred_region
      _
    $region5: #{tpu_custom_call.1} parent=1 // pred_fallthru
      _
    // Predicated region
    $region6: #{tpu_custom_call.1} parent=1 // pred_check
      _
    $region7: #{tpu_custom_call.1} parent=1 // pred_check_branch
      %14 = sbr.rel (0) target = $region9
    $region8: #{tpu_custom_call.1} parent=1 // pred_region
      _
    $region9: #{tpu_custom_call.1} parent=1 // pred_fallthru
      _
    // Predicated region
    $region10: #{tpu_custom_call.1} parent=1 // pred_check
      _
    $region11: #{tpu_custom_call.1} parent=1 // pred_check_branch
      %16 = sbr.rel (0) target = $region13
    $region12: #{tpu_custom_call.1} parent=1 // pred_region
      _
    $region13: #{tpu_custom_call.1} parent=1 // pred_fallthru
      _
    // Predicated region
    $region14: #{tpu_custom_call.1} parent=1 // pred_check
      _
    $region15: #{tpu_custom_call.1} parent=1 // pred_check_branch
      %18 = sbr.rel (0) target = $region17
    $region16: #{tpu_custom_call.1} parent=1 // pred_region
      _
    $region17: #{tpu_custom_call.1} parent=1 // pred_fallthru
      _
    // Predicated region
    $region18: #{tpu_custom_call.1} parent=1 // pred_check
      _
    $region19: #{tpu_custom_call.1} parent=1 // pred_check_branch
      %20 = sbr.rel (0) target = $region21
    $region20: #{tpu_custom_call.1} parent=1 // pred_region
      _
    $region21: #{tpu_custom_call.1} parent=1 // pred_fallthru
      _
    %v21 = vld [vmem:[%s0] sm:$0xff]
    %v22 = vld [vmem:[%s0 + $0x8] sm:$0xff]
    %v23 = vld [vmem:[%s1] sm:$0xff]
    %v24 = vld [vmem:[%s1 + $0x8] sm:$0xff]
    %v25 = vld [vmem:[%s1 + $0x10] sm:$0xff]
    %v26 = vld [vmem:[%s1 + $0x18] sm:$0xff]
    %v27 = vld [vmem:[%s1 + $0x20] sm:$0xff]
    %v28 = vld [vmem:[%s1 + $0x28] sm:$0xff]
    %v29 = vld [vmem:[%s1 + $0x30] sm:$0xff]
    %v30 = vld [vmem:[%s1 + $0x38] sm:$0xff]
    %v31 = vld [vmem:[%s1 + $0x40] sm:$0xff]
    %v32 = vld [vmem:[%s1 + $0x48] sm:$0xff]
    %v33 = vld [vmem:[%s1 + $0x50] sm:$0xff]
    %v34 = vld [vmem:[%s1 + $0x58] sm:$0xff]
    %v35 = vld [vmem:[%s1 + $0x60] sm:$0xff]
    %v36 = vld [vmem:[%s1 + $0x68] sm:$0xff]
    %v37 = vld [vmem:[%s1 + $0x70] sm:$0xff]
    %v38 = vld [vmem:[%s1 + $0x78] sm:$0xff]
    %v39 = vld [vmem:[%s1 + $0x80] sm:$0xff]
    %v40 = vld [vmem:[%s1 + $0x88] sm:$0xff]
    %v41 = vld [vmem:[%s1 + $0x90] sm:$0xff]
    %v42 = vld [vmem:[%s1 + $0x98] sm:$0xff]
    %v43 = vld [vmem:[%s1 + $0xa0] sm:$0xff]
    %v44 = vld [vmem:[%s1 + $0xa8] sm:$0xff]
    %v45 = vld [vmem:[%s1 + $0xb0] sm:$0xff]
    %v46 = vld [vmem:[%s1 + $0xb8] sm:$0xff]
    %v47 = vld [vmem:[%s1 + $0xc0] sm:$0xff]
    %v48 = vld [vmem:[%s1 + $0xc8] sm:$0xff]
    %v49 = vld [vmem:[%s1 + $0xd0] sm:$0xff]
    %v50 = vld [vmem:[%s1 + $0xd8] sm:$0xff]
    %v51 = vld [vmem:[%s1 + $0xe0] sm:$0xff]
    %v52 = vld [vmem:[%s1 + $0xe8] sm:$0xff]
    %v53 = vld [vmem:[%s1 + $0xf0] sm:$0xff]
    %v54 = vld [vmem:[%s1 + $0xf8] sm:$0x3]
    %v55 = vld [vmem:[%s2] sm:$0x1]
    %v57 = vperm.slane %v55, 0
    %vm59 = vcmask 998400
    %v61 = vsel %vm59, %v22, 0
    %vm63 = vcmask 1041408
    %v65 = vsel %vm63, %v54, 0
    %67 = vmatpush.msra.mxu0 %v38
    %68 = vmatpush.msra.mxu0 %v37
    %69 = vmatpush.msra.mxu0 %v36
    %70 = vmatpush.msra.mxu0 %v35
    %71 = vmatpush.msra.mxu0 %v34
    %72 = vmatpush.msra.mxu0 %v33
    %73 = vmatpush.msra.mxu0 %v32
    %74 = vmatpush.msra.mxu0 %v31
    %75 = vmatpush.msra.mxu0 %v30
    %76 = vmatpush.msra.mxu0 %v29
    %77 = vmatpush.msra.mxu0 %v28
    %78 = vmatpush.msra.mxu0 %v27
    %79 = vmatpush.msra.mxu0 %v26
    %80 = vmatpush.msra.mxu0 %v25
    %81 = vmatpush.msra.mxu0 %v24
    %82 = vmatpush.msra.mxu0 %v23
    %83 = vmatmul.f32.gmra.mxu0 %v21
    %v84 = vpop.f32.mrf.mxu0
    %v85 = vadd.f32 %v57, %v84
    %86 = vdwg.mxu0
    %87 = vmatpush.msra.mxu0 %v65
    %88 = vmatpush.msra.mxu0 %v53
    %89 = vmatpush.msra.mxu0 %v52
    %90 = vmatpush.msra.mxu0 %v51
    %91 = vmatpush.msra.mxu0 %v50
    %92 = vmatpush.msra.mxu0 %v49
    %93 = vmatpush.msra.mxu0 %v48
    %94 = vmatpush.msra.mxu0 %v47
    %95 = vmatpush.msra.mxu0 %v46
    %96 = vmatpush.msra.mxu0 %v45
    %97 = vmatpush.msra.mxu0 %v44
    %98 = vmatpush.msra.mxu0 %v43
    %99 = vmatpush.msra.mxu0 %v42
    %100 = vmatpush.msra.mxu0 %v41
    %101 = vmatpush.msra.mxu0 %v40
    %102 = vmatpush.msra.mxu0 %v39
    %103 = vmatmul.f32.gmra.mxu0 %v61
    %v104 = vpop.f32.mrf.mxu0
    %v105 = vadd.f32 %v85, %v104
    %106 = vdwg.mxu0
    %v107 = vmax.f32 %v105, 0.0
    %v108 = vld [vmem:[%s3] sm:$0xff]
    %v109 = vld [vmem:[%s4] sm:$0xff]
    %111 = vset.pattern.permute.xlu0 0
    %112 = vperm.xlu0 %111, %v109
    %v113 = vpop.permute.xlu0 %112
    %vm115 = vcmask 523264
    %v117 = vsel %vm115, %v108, 0
    %v120 = vsel %vm115, %v107, 0
    %122 = vmatpush.xpose.msra.mxu0 0.0
    %123 = vmatpush.xpose.msra.mxu0 0.0
    %124 = vmatpush.xpose.msra.mxu0 0.0
    %125 = vmatpush.xpose.msra.mxu0 0.0
    %126 = vmatpush.xpose.msra.mxu0 0.0
    %127 = vmatpush.xpose.msra.mxu0 0.0
    %128 = vmatpush.xpose.msra.mxu0 0.0
    %129 = vmatpush.xpose.msra.mxu0 0.0
    %130 = vmatpush.xpose.msra.mxu0 0.0
    %131 = vmatpush.xpose.msra.mxu0 0.0
    %132 = vmatpush.xpose.msra.mxu0 0.0
    %133 = vmatpush.xpose.msra.mxu0 0.0
    %134 = vmatpush.xpose.msra.mxu0 0.0
    %135 = vmatpush.xpose.msra.mxu0 0.0
    %136 = vmatpush.xpose.msra.mxu0 0.0
    %137 = vmatpush.xpose.msra.mxu0 %v120
    %138 = vmatmul.f32.gmra.mxu0 %v117
    %v139 = vpop.f32.mrf.mxu0
    %v140 = vadd.f32 %v113, %v139
    %141 = vdwg.mxu0
    %vm142 = vcmask 64512
    %143 = vst.msk [vmem:[#allocation2] sm:$0xff] %vm142, %v140
    // Predicated region
    $region22: #{tpu_custom_call.1} parent=1 // pred_check
      _
    $region23: #{tpu_custom_call.1} parent=1 // pred_check_branch
      %145 = sbr.rel (0) target = $region25
    $region24: #{tpu_custom_call.1} parent=1 // pred_region
      %147 = vsyncadd [#allocation3], 0
      %s149 = sshll.u32 [#allocation2], 4
      %s150 = int_to_ptr.vmem [resolvable:$true] %s149
      %s151 = sshll.u32 %s5, 4
      %s152 = int_to_ptr.hbm [resolvable:$true] %s151
      %154 = dma.vmem_to_hbm [thread:$0]  %s150, 128, %s152, [#allocation3]
    $region25: #{tpu_custom_call.1} parent=1 // pred_fallthru
      _
    // Predicated region
    $region26: #{tpu_custom_call.1} parent=1 // pred_check
      _
    $region27: #{tpu_custom_call.1} parent=1 // pred_check_branch
      %156 = sbr.rel (0) target = $region29
    $region28: #{tpu_custom_call.1} parent=1 // pred_region
      %158 = dma.done [#allocation3], 128
    $region29: #{tpu_custom_call.1} parent=1 // pred_fallthru
      _
    %159 = vsyncpa [#allocation3], 1

</llo_original>
